<compile_context>
chip_gen: v7x
topology: tpu7x:2x2x1
jax: 0.10.0
libtpu: 0.0.40
codegen_flags: <defaults>
</compile_context>

<pallas_src>
import functools

import jax
import jax.numpy as jnp
from jax.experimental import pallas as pl
from jax.experimental.pallas import tpu as pltpu


# ----------------------------- Pallas kernel ---------------------------------
def _two_tower_kernel(x_ref, w1_ref, b1_ref, w2_ref, b2_ref, out_ref):
    # x_ref  : [TB, Din]      bf16  one batch tile of [user_cat | item_cat]
    # w1_ref : [Din, Dh_pad]  bf16  block-diag(W1_user, W1_item), zero-padded cols
    # b1_ref : [1,  Dh_pad]   f32
    # w2_ref : [Dh_pad, 2*Dr] bf16  block-diag(W2_user, W2_item), zero-padded rows
    # b2_ref : [1, 2*Dr]      f32
    # out_ref: [1, 1, TB]     f32   lane-dense per-tile scores

    # Layer 1 for BOTH towers: bf16 x bf16 -> f32 accumulation on the MXU.
    h = jnp.dot(x_ref[...], w1_ref[...], preferred_element_type=jnp.float32)
    h = jnp.maximum(h + b1_ref[...], 0.0)                    # ReLU
    # TODO(synk): training-mode Dropout(0.4) not implemented (eval-mode identity).
    h = h.astype(jnp.bfloat16)

    # Layer 2 for BOTH towers.
    rep = jnp.dot(h, w2_ref[...], preferred_element_type=jnp.float32) + b2_ref[...]

    d = rep.shape[1] // 2
    u_rep = rep[:, :d]                                       # [TB, Dr] user tower
    i_rep = rep[:, d:]                                       # [TB, Dr] item tower

    # score = (u * i).sum(-1), written lane-dense along the tile axis.
    score = jnp.sum(u_rep * i_rep, axis=1)                   # [TB]
    out_ref[...] = score.reshape(1, 1, -1)


# ------------------------------- helpers --------------------------------------
def _block_diag(a, b):
    ra, ca = a.shape
    rb, cb = b.shape
    top = jnp.concatenate([a, jnp.zeros((ra, cb), a.dtype)], axis=1)
    bot = jnp.concatenate([jnp.zeros((rb, ca), b.dtype), b], axis=1)
    return jnp.concatenate([top, bot], axis=0)


def _round_up(x, m):
    return ((x + m - 1) // m) * m


def gather_concat_user(params, user_features):
    # user_features: [B, 2] int32 -> [B, d_id + d_ft]
    e = params["emb"]
    return jnp.concatenate(
        [e["user_idx"][user_features[:, 0]], e["country_idx"][user_features[:, 1]]],
        axis=1,
    )


def gather_concat_item(params, item_features):
    # item_features: [B, 3] int32 -> [B, d_id + 2*d_ft]
    e = params["emb"]
    return jnp.concatenate(
        [
            e["item_idx"][item_features[:, 0]],
            e["description_idx"][item_features[:, 1]],
            e["price_bin_idx"][item_features[:, 2]],
        ],
        axis=1,
    )


# ------------------------------- forward --------------------------------------
@functools.partial(jax.jit, static_argnames=("tb",))
def two_tower_forward(user_features, item_features, params, *, tb=512):
    """user_features: [B, 2] int32, item_features: [B, 3] int32 -> [B] f32 scores."""
    B = user_features.shape[0]
    w1u, b1u, w2u, b2u = params["user_mlp"]
    w1i, b1i, w2i, b2i = params["item_mlp"]

    # ---- embedding gathers + concat (tiny; plain JAX glue) -----------------------
    user_cat = gather_concat_user(params, user_features)     # [B, Du]
    item_cat = gather_concat_item(params, item_features)     # [B, Di]
    x = jnp.concatenate([user_cat, item_cat], axis=1)        # [B, Du+Di]

    # ---- fuse the two towers into one block-diagonal MLP (tiny one-time glue) ----
    w1 = _block_diag(w1u, w1i)                               # [Du+Di, 2(Du+Di)]
    b1 = jnp.concatenate([b1u, b1i], axis=1)                 # [1, 2(Du+Di)]
    w2 = _block_diag(w2u, w2i)                               # [2(Du+Di), 2*Dout]
    b2 = jnp.concatenate([b2u, b2i], axis=1)                 # [1, 2*Dout]

    # Pad the hidden width up to a multiple of 128 so `h` is lane-dense and the
    # second matmul has an aligned K.  Zero columns of W1 / zero bias produce
    # ReLU(0)=0 rows that hit zero-padded rows of W2 -> bit-identical results.
    dh = w1.shape[1]
    dh_pad = _round_up(dh, 128)
    if dh_pad != dh:
        w1 = jnp.pad(w1, ((0, 0), (0, dh_pad - dh)))
        b1 = jnp.pad(b1, ((0, 0), (0, dh_pad - dh)))
        w2 = jnp.pad(w2, ((0, dh_pad - dh), (0, 0)))

    # bf16 operand stream into the MXU; accumulation stays f32 inside the kernel.
    x = x.astype(jnp.bfloat16)
    w1 = w1.astype(jnp.bfloat16)
    w2 = w2.astype(jnp.bfloat16)

    # ---- batch tiling: TB rows per grid step (multiple of 128 -> lane-dense out) ----
    tb_eff = min(int(tb), _round_up(B, 128))
    tb_eff = _round_up(tb_eff, 128)
    b_pad = _round_up(B, tb_eff)
    n_tiles = b_pad // tb_eff
    if b_pad != B:
        x = jnp.pad(x, ((0, b_pad - B), (0, 0)))

    din = x.shape[1]
    drep = w2.shape[1]

    out = pl.pallas_call(
        _two_tower_kernel,
        out_shape=jax.ShapeDtypeStruct((n_tiles, 1, tb_eff), jnp.float32),
        grid_spec=pltpu.PrefetchScalarGridSpec(
            num_scalar_prefetch=0,
            grid=(n_tiles,),
            in_specs=[
                # activations: streamed per batch tile (auto double-buffered DMA)
                pl.BlockSpec((tb_eff, din), lambda i: (i, 0)),
                # weights / biases: VMEM-resident across all grid steps
                pl.BlockSpec((din, dh_pad), lambda i: (0, 0)),
                pl.BlockSpec((1, dh_pad), lambda i: (0, 0)),
                pl.BlockSpec((dh_pad, drep), lambda i: (0, 0)),
                pl.BlockSpec((1, drep), lambda i: (0, 0)),
            ],
            out_specs=pl.BlockSpec((1, 1, tb_eff), lambda i: (i, 0, 0)),
        ),
        compiler_params=pltpu.CompilerParams(
            # independent batch tiles -> megacore sharding on v7x
            dimension_semantics=("parallel",),
        ),
    )(x, w1, b1, w2, b2)

    return out.reshape(-1)[:B]


# --------------------------- parameter construction ---------------------------
def xavier_uniform(key, shape):
    # nn.init.xavier_uniform_ on a [fan_out, fan_in]-style 2-D tensor
    fan_in, fan_out = shape[1], shape[0]
    bound = (6.0 / (fan_in + fan_out)) ** 0.5
    return jax.random.uniform(key, shape, jnp.float32, -bound, bound)


def build_params(key, cfg, vocab_sizes):
    d_id = cfg["embedding_dim_ids"]
    d_ft = cfg["embedding_dim_features"]
    d_out = cfg["final_mlp_embed_dim"]

    keys = iter(jax.random.split(key, 16))

    # Embedding tables (xavier_uniform, matching _init_weights)
    emb = {
        "user_idx": xavier_uniform(next(keys), (vocab_sizes["user_idx"], d_id)),
        "country_idx": xavier_uniform(next(keys), (vocab_sizes["country_idx"], d_ft)),
        "item_idx": xavier_uniform(next(keys), (vocab_sizes["item_idx"], d_id)),
        "description_idx": xavier_uniform(next(keys), (vocab_sizes["description_idx"], d_ft)),
        "price_bin_idx": xavier_uniform(next(keys), (vocab_sizes["price_bin_idx"], d_ft)),
    }

    du = d_id + d_ft            # user concat dim (id + country)
    di = d_id + 2 * d_ft        # item concat dim (id + description + price_bin)

    def linear(key, in_dim, out_dim):
        # PyTorch weight is [out, in]; xavier over that shape, then transpose to [in, out].
        w_pt = xavier_uniform(key, (out_dim, in_dim))
        return w_pt.T, jnp.zeros((1, out_dim), jnp.float32)

    w1u, b1u = linear(next(keys), du, du * 2)
    w2u, b2u = linear(next(keys), du * 2, d_out)
    w1i, b1i = linear(next(keys), di, di * 2)
    w2i, b2i = linear(next(keys), di * 2, d_out)

    return {
        "emb": emb,
        "user_mlp": (w1u, b1u, w2u, b2u),
        "item_mlp": (w1i, b1i, w2i, b2i),
    }


# ------------------------------- reference ------------------------------------
def reference_forward(user_features, item_features, params):
    """Pure-JAX reference using the same bf16-operand / f32-accumulation policy."""
    user_cat = gather_concat_user(params, user_features)
    item_cat = gather_concat_item(params, item_features)

    def tower(xcat, w1, b1, w2, b2):
        h = jnp.dot(xcat.astype(jnp.bfloat16), w1.astype(jnp.bfloat16),
                    preferred_element_type=jnp.float32) + b1
        h = jnp.maximum(h, 0.0).astype(jnp.bfloat16)
        return jnp.dot(h, w2.astype(jnp.bfloat16),
                       preferred_element_type=jnp.float32) + b2

    u = tower(user_cat, *params["user_mlp"])
    i = tower(item_cat, *params["item_mlp"])
    return jnp.sum(u * i, axis=1)


# ---------------------------------- main ---------------------------------------
if __name__ == "__main__":
    cfg = {
        "embedding_dim_ids": 16,
        "embedding_dim_features": 8,
        "final_mlp_embed_dim": 32,
    }
    vocab_sizes = {
        "user_idx": 50,
        "country_idx": 10,
        "item_idx": 64,
        "description_idx": 40,
        "price_bin_idx": 6,
    }

    key = jax.random.PRNGKey(0)
    k_params, k_feat = jax.random.split(key)
    params = build_params(k_params, cfg, vocab_sizes)

    # Case 1: toy batch (single padded tile).  Case 2: B=300 with TB=128 -> 3 grid
    # steps, exercising batch tiling, resident weights, tail padding & parallel axis.
    for B, tb in [(8, 512), (300, 128)]:
        kb = jax.random.fold_in(k_feat, B)
        k_u, k_c, k_i, k_d, k_p = jax.random.split(kb, 5)

        user_features = jnp.stack(
            [
                jax.random.randint(k_u, (B,), 0, vocab_sizes["user_idx"]),
                jax.random.randint(k_c, (B,), 0, vocab_sizes["country_idx"]),
            ],
            axis=1,
        ).astype(jnp.int32)                  # [B, 2]
        item_features = jnp.stack(
            [
                jax.random.randint(k_i, (B,), 0, vocab_sizes["item_idx"]),
                jax.random.randint(k_d, (B,), 0, vocab_sizes["description_idx"]),
                jax.random.randint(k_p, (B,), 0, vocab_sizes["price_bin_idx"]),
            ],
            axis=1,
        ).astype(jnp.int32)                  # [B, 3]

        out = two_tower_forward(user_features, item_features, params, tb=tb)
        out = jax.block_until_ready(out)

        ref = reference_forward(user_features, item_features, params)
        assert out.shape == (B,), (out.shape, B)
        assert jnp.allclose(out, ref, atol=1e-3, rtol=1e-3), (B, out, ref)

    print("KERNEL_OK")
</pallas_src>

<mosaic_0001>
module attributes {stable_mosaic.version = 11 : i64} {
  func.func @_two_tower_kernel(%arg0: i32, %arg1: memref<128x56xbf16, #tpu.memory_space<vmem>>, %arg2: memref<56x128xbf16, #tpu.memory_space<vmem>>, %arg3: memref<1x128xf32, #tpu.memory_space<vmem>>, %arg4: memref<128x64xbf16, #tpu.memory_space<vmem>>, %arg5: memref<1x64xf32, #tpu.memory_space<vmem>>, %arg6: memref<1x1x128xf32, #tpu.memory_space<vmem>>) attributes {dimension_semantics = [#tpu.dimension_semantics<parallel>], iteration_bounds = array<i64: 1>, scalar_prefetch = 0 : i64, scratch_operands = 0 : i64, tpu.core_type = #tpu.core_type<tc>, window_params = [{transform_indices = @transform_0, window_bounds = array<i64: 128, 56>}, {pipeline_mode = #tpu.pipeline_mode<synchronous>, transform_indices = @transform_1, window_bounds = array<i64: 56, 128>}, {pipeline_mode = #tpu.pipeline_mode<synchronous>, transform_indices = @transform_2, window_bounds = array<i64: 1, 128>}, {pipeline_mode = #tpu.pipeline_mode<synchronous>, transform_indices = @transform_3, window_bounds = array<i64: 128, 64>}, {pipeline_mode = #tpu.pipeline_mode<synchronous>, transform_indices = @transform_4, window_bounds = array<i64: 1, 64>}, {transform_indices = @transform_5, window_bounds = array<i64: 1, 1, 128>}]} {
    %c0 = arith.constant 0 : index
    %c0_0 = arith.constant 0 : index
    %0 = vector.load %arg1[%c0, %c0_0] : memref<128x56xbf16, #tpu.memory_space<vmem>>, vector<128x56xbf16>
    %c0_1 = arith.constant 0 : index
    %c0_2 = arith.constant 0 : index
    %1 = vector.load %arg2[%c0_1, %c0_2] : memref<56x128xbf16, #tpu.memory_space<vmem>>, vector<56x128xbf16>
    %cst = arith.constant dense<0.000000e+00> : vector<128x128xf32>
    %2 = tpu.matmul %0, %1, %cst {dimension_numbers = #tpu.dot_dimension_numbers<[1], [0], [0], [1], [0, 0, 1, 1], [], []>} : vector<128x56xbf16>, vector<56x128xbf16>, vector<128x128xf32> -> vector<128x128xf32>
    %c0_3 = arith.constant 0 : index
    %c0_4 = arith.constant 0 : index
    %3 = vector.load %arg3[%c0_3, %c0_4] : memref<1x128xf32, #tpu.memory_space<vmem>>, vector<1x128xf32>
    %4 = vector.broadcast %3 : vector<1x128xf32> to vector<128x128xf32>
    %5 = arith.addf %2, %4 : vector<128x128xf32>
    %cst_5 = arith.constant 0.000000e+00 : f32
    %6 = vector.broadcast %cst_5 : f32 to vector<128x128xf32>
    %7 = arith.maximumf %5, %6 : vector<128x128xf32>
    %8 = arith.truncf %7 : vector<128x128xf32> to vector<128x128xbf16>
    %c0_6 = arith.constant 0 : index
    %c0_7 = arith.constant 0 : index
    %9 = vector.load %arg4[%c0_6, %c0_7] : memref<128x64xbf16, #tpu.memory_space<vmem>>, vector<128x64xbf16>
    %cst_8 = arith.constant dense<0.000000e+00> : vector<128x64xf32>
    %10 = tpu.matmul %8, %9, %cst_8 {dimension_numbers = #tpu.dot_dimension_numbers<[1], [0], [0], [1], [0, 0, 1, 1], [], []>} : vector<128x128xbf16>, vector<128x64xbf16>, vector<128x64xf32> -> vector<128x64xf32>
    %c0_9 = arith.constant 0 : index
    %c0_10 = arith.constant 0 : index
    %11 = vector.load %arg5[%c0_9, %c0_10] : memref<1x64xf32, #tpu.memory_space<vmem>>, vector<1x64xf32>
    %12 = vector.broadcast %11 : vector<1x64xf32> to vector<128x64xf32>
    %13 = arith.addf %10, %12 : vector<128x64xf32>
    %14 = vector.extract_strided_slice %13 {offsets = [0, 0], sizes = [128, 32], strides = [1, 1]} : vector<128x64xf32> to vector<128x32xf32>
    %15 = vector.extract_strided_slice %13 {offsets = [0, 32], sizes = [128, 32], strides = [1, 1]} : vector<128x64xf32> to vector<128x32xf32>
    %16 = arith.mulf %14, %15 : vector<128x32xf32>
    %cst_11 = arith.constant dense<0.000000e+00> : vector<128xf32>
    %17 = vector.multi_reduction <add>, %16, %cst_11 [1] : vector<128x32xf32> to vector<128xf32>
    %18 = vector.shape_cast %17 : vector<128xf32> to vector<1x1x128xf32>
    %c0_12 = arith.constant 0 : index
    %c0_13 = arith.constant 0 : index
    %c0_14 = arith.constant 0 : index
    %19 = vector.load %arg6[%c0_12, %c0_13, %c0_14] : memref<1x1x128xf32, #tpu.memory_space<vmem>>, vector<1x1x128xf32>
    tpu.vector_store %arg6[%c0_12, %c0_13, %c0_14], %18 {strides = array<i32>} : memref<1x1x128xf32, #tpu.memory_space<vmem>>, vector<1x1x128xf32>,
    return
  }
  func.func @transform_0(%arg0: i32) -> (i32, i32) {
    %c0_i32 = arith.constant 0 : i32
    %c0_i32_0 = arith.constant 0 : i32
    return %arg0, %c0_i32 : i32, i32
  }
  func.func @transform_1(%arg0: i32) -> (i32, i32) {
    %c0_i32 = arith.constant 0 : i32
    %c0_i32_0 = arith.constant 0 : i32
    %c0_i32_1 = arith.constant 0 : i32
    return %c0_i32, %c0_i32_0 : i32, i32
  }
  func.func @transform_2(%arg0: i32) -> (i32, i32) {
    %c0_i32 = arith.constant 0 : i32
    %c0_i32_0 = arith.constant 0 : i32
    %c0_i32_1 = arith.constant 0 : i32
    return %c0_i32, %c0_i32_0 : i32, i32
  }
  func.func @transform_3(%arg0: i32) -> (i32, i32) {
    %c0_i32 = arith.constant 0 : i32
    %c0_i32_0 = arith.constant 0 : i32
    %c0_i32_1 = arith.constant 0 : i32
    return %c0_i32, %c0_i32_0 : i32, i32
  }
  func.func @transform_4(%arg0: i32) -> (i32, i32) {
    %c0_i32 = arith.constant 0 : i32
    %c0_i32_0 = arith.constant 0 : i32
    %c0_i32_1 = arith.constant 0 : i32
    return %c0_i32, %c0_i32_0 : i32, i32
  }
  func.func @transform_5(%arg0: i32) -> (i32, i32, i32) {
    %c0_i32 = arith.constant 0 : i32
    %c0_i32_0 = arith.constant 0 : i32
    %c0_i32_1 = arith.constant 0 : i32
    return %arg0, %c0_i32, %c0_i32_0 : i32, i32, i32
  }
}

</mosaic_0001>

<llo_original>
// kernel: two_tower_forward.1
$region0: #{two_tower_forward.1}
  #allocation0 [shape = 'u32[]', space=smem, size = 0x4, offset = 0x4, fixed_abs, tag = 'smem constant byte address 0x4 - core index']
  #allocation1 [shape = 'u32[144,128]{1,0:T(1,128)}', space=vmem, size = 0x12000, scoped, tag = 'internal scratch']
  %s0 = inlined_call_operand.vmem [shape: bf16[128,56], index: 0, kind: input, shape index: {}]
  %s1 = inlined_call_operand.vmem [shape: bf16[56,128], index: 1, kind: input, shape index: {}]
  %s2 = inlined_call_operand.vmem [shape: f32[1,128], index: 2, kind: input, shape index: {}]
  %s3 = inlined_call_operand.vmem [shape: bf16[128,64], index: 3, kind: input, shape index: {}]
  %s4 = inlined_call_operand.vmem [shape: f32[1,64], index: 4, kind: input, shape index: {}]
  %s5 = inlined_call_operand.vmem [shape: f32[1,1,128], index: 5, kind: output, shape index: {}]
  %s6 = sld [smem:[#allocation0]]
  $region30: #{two_tower_forward.1} parent=0
    _
  %s8 = ssub.s32 1, %s6
  %s9 = scalar_select 0, %s8, %s6
  // Predicated region
  $region2: #{two_tower_forward.1} parent=0 // pred_check
    _
  $region3: #{two_tower_forward.1} parent=0 // pred_check_branch
    %11 = sbr.rel (0) target = $region5
  $region4: #{two_tower_forward.1} parent=0 // pred_region
    _
  $region5: #{two_tower_forward.1} parent=0 // pred_fallthru
    _
  // Predicated region
  $region6: #{two_tower_forward.1} parent=0 // pred_check
    _
  $region7: #{two_tower_forward.1} parent=0 // pred_check_branch
    %13 = sbr.rel (0) target = $region9
  $region8: #{two_tower_forward.1} parent=0 // pred_region
    _
  $region9: #{two_tower_forward.1} parent=0 // pred_fallthru
    _
  // Predicated region
  $region10: #{two_tower_forward.1} parent=0 // pred_check
    _
  $region11: #{two_tower_forward.1} parent=0 // pred_check_branch
    %15 = sbr.rel (0) target = $region13
  $region12: #{two_tower_forward.1} parent=0 // pred_region
    _
  $region13: #{two_tower_forward.1} parent=0 // pred_fallthru
    _
  // Predicated region
  $region14: #{two_tower_forward.1} parent=0 // pred_check
    _
  $region15: #{two_tower_forward.1} parent=0 // pred_check_branch
    %17 = sbr.rel (0) target = $region17
  $region16: #{two_tower_forward.1} parent=0 // pred_region
    _
  $region17: #{two_tower_forward.1} parent=0 // pred_fallthru
    _
  // Predicated region
  $region18: #{two_tower_forward.1} parent=0 // pred_check
    _
  $region19: #{two_tower_forward.1} parent=0 // pred_check_branch
    %19 = sbr.rel (0) target = $region21
  $region20: #{two_tower_forward.1} parent=0 // pred_region
    _
  $region21: #{two_tower_forward.1} parent=0 // pred_fallthru
    _
  %v21 = vld [vmem:[%s0] sm:$0xf]
  %v22 = vld [vmem:[%s0 + $0x4] sm:$0xf]
  %v23 = vld [vmem:[%s0 + $0x8] sm:$0xf]
  %v24 = vld [vmem:[%s0 + $0xc] sm:$0xf]
  %v25 = vld [vmem:[%s0 + $0x10] sm:$0xf]
  %v26 = vld [vmem:[%s0 + $0x14] sm:$0xf]
  %v27 = vld [vmem:[%s0 + $0x18] sm:$0xf]
  %v28 = vld [vmem:[%s0 + $0x1c] sm:$0xf]
  %v29 = vld [vmem:[%s0 + $0x20] sm:$0xf]
  %v30 = vld [vmem:[%s0 + $0x24] sm:$0xf]
  %v31 = vld [vmem:[%s0 + $0x28] sm:$0xf]
  %v32 = vld [vmem:[%s0 + $0x2c] sm:$0xf]
  %v33 = vld [vmem:[%s0 + $0x30] sm:$0xf]
  %v34 = vld [vmem:[%s0 + $0x34] sm:$0xf]
  %v35 = vld [vmem:[%s0 + $0x38] sm:$0xf]
  %v36 = vld [vmem:[%s0 + $0x3c] sm:$0xf]
  %v37 = vld [vmem:[%s1] sm:$0xf]
  %v38 = vld [vmem:[%s1 + $0x4] sm:$0xf]
  %v39 = vld [vmem:[%s1 + $0x8] sm:$0xf]
  %v40 = vld [vmem:[%s1 + $0xc] sm:$0xf]
  %v41 = vld [vmem:[%s1 + $0x10] sm:$0xf]
  %v42 = vld [vmem:[%s1 + $0x14] sm:$0xf]
  %v43 = vld [vmem:[%s1 + $0x18] sm:$0xf]
  %v44 = vld [vmem:[%s2] sm:$0x1]
  %v46 = vlaneseq
  %v47 = vshrl.u32 %v46, 7
  %v48 = vsub.s32 0, %v47
  %v49 = vrot.slane %v44, %v48
  %v67 = vunpack.c.l.b16 %v21
  %v68 = vunpack.c.l.b16 %v22
  %v69 = vunpack.c.l.b16 %v23
  %v70 = vunpack.c.l.b16 %v24
  %v71 = vunpack.c.l.b16 %v25
  %v72 = vunpack.c.l.b16 %v26
  %v73 = vunpack.c.l.b16 %v27
  %v74 = vunpack.c.l.b16 %v28
  %v75 = vunpack.c.l.b16 %v29
  %v76 = vunpack.c.l.b16 %v30
  %v77 = vunpack.c.l.b16 %v31
  %v78 = vunpack.c.l.b16 %v32
  %v79 = vunpack.c.l.b16 %v33
  %v80 = vunpack.c.l.b16 %v34
  %v81 = vunpack.c.l.b16 %v35
  %v82 = vunpack.c.l.b16 %v36
  %v83 = vpack.c.b16 %v68, %v67
  %v84 = vpack.c.b16 %v70, %v69
  %v85 = vpack.c.b16 %v72, %v71
  %v86 = vpack.c.b16 %v74, %v73
  %v87 = vpack.c.b16 %v76, %v75
  %v88 = vpack.c.b16 %v78, %v77
  %v89 = vpack.c.b16 %v80, %v79
  %v90 = vpack.c.b16 %v82, %v81
  %v98 = vunpack.c.l.b16 %v37
  %v99 = vunpack.c.l.b16 %v38
  %v100 = vunpack.c.l.b16 %v39
  %v101 = vunpack.c.l.b16 %v40
  %v102 = vunpack.c.l.b16 %v41
  %v103 = vunpack.c.l.b16 %v42
  %v104 = vunpack.c.l.b16 %v43
  %v105 = vpack.c.b16 %v99, %v98
  %v106 = vpack.c.b16 %v101, %v100
  %v107 = vpack.c.b16 %v103, %v102
  %v108 = vpack.c.b16 %v104, %v104
  %vm112 = vcmask 457728
  %v114 = vsel %vm112, %v83, 0
  %v117 = vsel %vm112, %v84, 0
  %v120 = vsel %vm112, %v85, 0
  %v123 = vsel %vm112, %v86, 0
  %v126 = vsel %vm112, %v87, 0
  %v129 = vsel %vm112, %v88, 0
  %v132 = vsel %vm112, %v89, 0
  %v135 = vsel %vm112, %v90, 0
  %vm137 = vcmask 1043456
  %v139 = vsel %vm137, %v108, 0
  %141 = vmatprep.subr.bf16.mxu0 0
  %142 = vmatpush1.bf16.msra.mxu0 %v105
  %143 = vmatprep.subr.bf16.mxu0 0
  %144 = vmatpush1.bf16.msra.mxu0 %v106
  %145 = vmatprep.subr.bf16.mxu0 0
  %146 = vmatpush1.bf16.msra.mxu0 %v107
  %147 = vmatprep.subr.bf16.mxu0 0
  %148 = vmatpush1.bf16.msra.mxu0 %v139
  %149 = vmatprep.subr.bf16.mxu0 0
  %150 = vmatpush1.bf16.msra.mxu0 0
  %151 = vmatprep.subr.bf16.mxu0 0
  %152 = vmatpush1.bf16.msra.mxu0 0
  %153 = vmatprep.subr.bf16.mxu0 0
  %154 = vmatpush1.bf16.msra.mxu0 0
  %155 = vmatprep.subr.bf16.mxu0 0
  %156 = vmatpush1.bf16.msra.mxu0 0
  %157 = vmatprep.subr.bf16.mxu0 0
  %158 = vmatpush1.bf16.msra.mxu0 0
  %159 = vmatprep.subr.bf16.mxu0 0
  %160 = vmatpush1.bf16.msra.mxu0 0
  %161 = vmatprep.subr.bf16.mxu0 0
  %162 = vmatpush1.bf16.msra.mxu0 0
  %163 = vmatprep.subr.bf16.mxu0 0
  %164 = vmatpush1.bf16.msra.mxu0 0
  %165 = vmatprep.subr.bf16.mxu0 0
  %166 = vmatpush1.bf16.msra.mxu0 0
  %167 = vmatprep.subr.bf16.mxu0 0
  %168 = vmatpush1.bf16.msra.mxu0 0
  %169 = vmatprep.subr.bf16.mxu0 0
  %170 = vmatpush1.bf16.msra.mxu0 0
  %171 = vmatprep.subr.bf16.mxu0 0
  %172 = vmatpush1.bf16.msra.mxu0 0
  %173 = vmatprep.mubr.bf16.mxu0 0
  %174 = vmatmul.mubr.bf16.gmra.mrb[0].mxu0 %v114
  %v175 = vpop.f32.mrb[0].mxu0
  %v176 = vadd.f32 %v49, %v175
  %v177 = vpop.f32.mrb[0].mxu0
  %v178 = vpop.f32.mrb[0].mxu0
  %v179 = vadd.f32 %v49, %v178
  %v180 = vpop.f32.mrb[0].mxu0
  %181 = vmatprep.mubr.bf16.mxu0 0
  %182 = vmatmul.mubr.bf16.gmra.mrb[0].mxu0 %v117
  %v183 = vpop.f32.mrb[0].mxu0
  %v184 = vadd.f32 %v49, %v183
  %v185 = vpop.f32.mrb[0].mxu0
  %v186 = vpop.f32.mrb[0].mxu0
  %v187 = vadd.f32 %v49, %v186
  %v188 = vpop.f32.mrb[0].mxu0
  %189 = vmatprep.mubr.bf16.mxu0 0
  %190 = vmatmul.mubr.bf16.gmra.mrb[0].mxu0 %v120
  %v191 = vpop.f32.mrb[0].mxu0
  %v192 = vadd.f32 %v49, %v191
  %v193 = vpop.f32.mrb[0].mxu0
  %v194 = vpop.f32.mrb[0].mxu0
  %v195 = vadd.f32 %v49, %v194
  %v196 = vpop.f32.mrb[0].mxu0
  %197 = vmatprep.mubr.bf16.mxu0 0
  %198 = vmatmul.mubr.bf16.gmra.mrb[0].mxu0 %v123
  %v199 = vpop.f32.mrb[0].mxu0
  %v200 = vadd.f32 %v49, %v199
  %v201 = vpop.f32.mrb[0].mxu0
  %v202 = vpop.f32.mrb[0].mxu0
  %v203 = vadd.f32 %v49, %v202
  %v204 = vpop.f32.mrb[0].mxu0
  %205 = vmatprep.mubr.bf16.mxu0 0
  %206 = vmatmul.mubr.bf16.gmra.mrb[0].mxu0 %v126
  %v207 = vpop.f32.mrb[0].mxu0
  %v208 = vadd.f32 %v49, %v207
  %v209 = vpop.f32.mrb[0].mxu0
  %v210 = vpop.f32.mrb[0].mxu0
  %v211 = vadd.f32 %v49, %v210
  %v212 = vpop.f32.mrb[0].mxu0
  %213 = vmatprep.mubr.bf16.mxu0 0
  %214 = vmatmul.mubr.bf16.gmra.mrb[0].mxu0 %v129
  %v215 = vpop.f32.mrb[0].mxu0
  %v216 = vadd.f32 %v49, %v215
  %v217 = vpop.f32.mrb[0].mxu0
  %v218 = vpop.f32.mrb[0].mxu0
  %v219 = vadd.f32 %v49, %v218
  %v220 = vpop.f32.mrb[0].mxu0
  %221 = vmatprep.mubr.bf16.mxu0 0
  %222 = vmatmul.mubr.bf16.gmra.mrb[0].mxu0 %v132
  %v223 = vpop.f32.mrb[0].mxu0
  %v224 = vadd.f32 %v49, %v223
  %v225 = vpop.f32.mrb[0].mxu0
  %v226 = vpop.f32.mrb[0].mxu0
  %v227 = vadd.f32 %v49, %v226
  %v228 = vpop.f32.mrb[0].mxu0
  %229 = vmatprep.mubr.bf16.mxu0 0
  %230 = vmatmul.mubr.bf16.gmra.mrb[0].mxu0 %v135
  %v231 = vpop.f32.mrb[0].mxu0
  %v232 = vadd.f32 %v49, %v231
  %v233 = vpop.f32.mrb[0].mxu0
  %v234 = vpop.f32.mrb[0].mxu0
  %v235 = vadd.f32 %v49, %v234
  %v236 = vpop.f32.mrb[0].mxu0
  %237 = vdwg.mxu0
  %v238 = vmax.f32 %v176, 0.0
  %v239 = vmax.f32 %v179, 0.0
  %v240 = vmax.f32 %v184, 0.0
  %v241 = vmax.f32 %v187, 0.0
  %v242 = vmax.f32 %v192, 0.0
  %v243 = vmax.f32 %v195, 0.0
  %v244 = vmax.f32 %v200, 0.0
  %v245 = vmax.f32 %v203, 0.0
  %v246 = vmax.f32 %v208, 0.0
  %v247 = vmax.f32 %v211, 0.0
  %v248 = vmax.f32 %v216, 0.0
  %v249 = vmax.f32 %v219, 0.0
  %v250 = vmax.f32 %v224, 0.0
  %v251 = vmax.f32 %v227, 0.0
  %v252 = vmax.f32 %v232, 0.0
  %v253 = vmax.f32 %v235, 0.0
  %v254 = vpack.c.bf16 %v239, %v238
  %v255 = vpack.c.bf16 %v241, %v240
  %v256 = vpack.c.bf16 %v243, %v242
  %v257 = vpack.c.bf16 %v245, %v244
  %v258 = vpack.c.bf16 %v247, %v246
  %v259 = vpack.c.bf16 %v249, %v248
  %v260 = vpack.c.bf16 %v251, %v250
  %v261 = vpack.c.bf16 %v253, %v252
  %v262 = vld [vmem:[%s3] sm:$0xf]
  %v263 = vld [vmem:[%s3 + $0x4] sm:$0xf]
  %v264 = vld [vmem:[%s3 + $0x8] sm:$0xf]
  %v265 = vld [vmem:[%s3 + $0xc] sm:$0xf]
  %v266 = vld [vmem:[%s3 + $0x10] sm:$0xf]
  %v267 = vld [vmem:[%s3 + $0x14] sm:$0xf]
  %v268 = vld [vmem:[%s3 + $0x18] sm:$0xf]
  %v269 = vld [vmem:[%s3 + $0x1c] sm:$0xf]
  %v270 = vld [vmem:[%s3 + $0x20] sm:$0xf]
  %v271 = vld [vmem:[%s3 + $0x24] sm:$0xf]
  %v272 = vld [vmem:[%s3 + $0x28] sm:$0xf]
  %v273 = vld [vmem:[%s3 + $0x2c] sm:$0xf]
  %v274 = vld [vmem:[%s3 + $0x30] sm:$0xf]
  %v275 = vld [vmem:[%s3 + $0x34] sm:$0xf]
  %v276 = vld [vmem:[%s3 + $0x38] sm:$0xf]
  %v277 = vld [vmem:[%s3 + $0x3c] sm:$0xf]
  %v278 = vld [vmem:[%s4] sm:$0x1]
  %v280 = vlaneseq
  %v281 = vshrl.u32 %v280, 7
  %v282 = vsub.s32 0, %v281
  %v283 = vrot.slane %v278, %v282
  %v301 = vunpack.c.l.b16 %v262
  %v302 = vunpack.c.l.b16 %v263
  %v303 = vunpack.c.l.b16 %v264
  %v304 = vunpack.c.l.b16 %v265
  %v305 = vunpack.c.l.b16 %v266
  %v306 = vunpack.c.l.b16 %v267
  %v307 = vunpack.c.l.b16 %v268
  %v308 = vunpack.c.l.b16 %v269
  %v309 = vunpack.c.l.b16 %v270
  %v310 = vunpack.c.l.b16 %v271
  %v311 = vunpack.c.l.b16 %v272
  %v312 = vunpack.c.l.b16 %v273
  %v313 = vunpack.c.l.b16 %v274
  %v314 = vunpack.c.l.b16 %v275
  %v315 = vunpack.c.l.b16 %v276
  %v316 = vunpack.c.l.b16 %v277
  %v317 = vpack.c.b16 %v302, %v301
  %v318 = vpack.c.b16 %v304, %v303
  %v319 = vpack.c.b16 %v306, %v305
  %v320 = vpack.c.b16 %v308, %v307
  %v321 = vpack.c.b16 %v310, %v309
  %v322 = vpack.c.b16 %v312, %v311
  %v323 = vpack.c.b16 %v314, %v313
  %v324 = vpack.c.b16 %v316, %v315
  %333 = vmatprep.subr.bf16.mxu0 0
  %334 = vmatpush1.bf16.msra.mxu0 %v317
  %335 = vmatprep.subr.bf16.mxu0 0
  %336 = vmatpush1.bf16.msra.mxu0 %v318
  %337 = vmatprep.subr.bf16.mxu0 0
  %338 = vmatpush1.bf16.msra.mxu0 %v319
  %339 = vmatprep.subr.bf16.mxu0 0
  %340 = vmatpush1.bf16.msra.mxu0 %v320
  %341 = vmatprep.subr.bf16.mxu0 0
  %342 = vmatpush1.bf16.msra.mxu0 %v321
  %343 = vmatprep.subr.bf16.mxu0 0
  %344 = vmatpush1.bf16.msra.mxu0 %v322
  %345 = vmatprep.subr.bf16.mxu0 0
  %346 = vmatpush1.bf16.msra.mxu0 %v323
  %347 = vmatprep.subr.bf16.mxu0 0
  %348 = vmatpush1.bf16.msra.mxu0 %v324
  %349 = vmatprep.subr.bf16.mxu0 0
  %350 = vmatpush1.bf16.msra.mxu0 0
  %351 = vmatprep.subr.bf16.mxu0 0
  %352 = vmatpush1.bf16.msra.mxu0 0
  %353 = vmatprep.subr.bf16.mxu0 0
  %354 = vmatpush1.bf16.msra.mxu0 0
  %355 = vmatprep.subr.bf16.mxu0 0
  %356 = vmatpush1.bf16.msra.mxu0 0
  %357 = vmatprep.subr.bf16.mxu0 0
  %358 = vmatpush1.bf16.msra.mxu0 0
  %359 = vmatprep.subr.bf16.mxu0 0
  %360 = vmatpush1.bf16.msra.mxu0 0
  %361 = vmatprep.subr.bf16.mxu0 0
  %362 = vmatpush1.bf16.msra.mxu0 0
  %363 = vmatprep.subr.bf16.mxu0 0
  %364 = vmatpush1.bf16.msra.mxu0 0
  %365 = vmatprep.mubr.bf16.mxu0 0
  %366 = vmatmul.mubr.bf16.gmra.mrb[0].mxu0 %v254
  %v367 = vpop.f32.mrb[0].mxu0
  %v368 = vadd.f32 %v283, %v367
  %v369 = vpop.f32.mrb[0].mxu0
  %v370 = vpop.f32.mrb[0].mxu0
  %v371 = vadd.f32 %v283, %v370
  %v372 = vpop.f32.mrb[0].mxu0
  %373 = vmatprep.mubr.bf16.mxu0 0
  %374 = vmatmul.mubr.bf16.gmra.mrb[0].mxu0 %v255
  %v375 = vpop.f32.mrb[0].mxu0
  %v376 = vadd.f32 %v283, %v375
  %v377 = vpop.f32.mrb[0].mxu0
  %v378 = vpop.f32.mrb[0].mxu0
  %v379 = vadd.f32 %v283, %v378
  %v380 = vpop.f32.mrb[0].mxu0
  %381 = vmatprep.mubr.bf16.mxu0 0
  %382 = vmatmul.mubr.bf16.gmra.mrb[0].mxu0 %v256
  %v383 = vpop.f32.mrb[0].mxu0
  %v384 = vadd.f32 %v283, %v383
  %v385 = vpop.f32.mrb[0].mxu0
  %v386 = vpop.f32.mrb[0].mxu0
  %v387 = vadd.f32 %v283, %v386
  %v388 = vpop.f32.mrb[0].mxu0
  %389 = vmatprep.mubr.bf16.mxu0 0
  %390 = vmatmul.mubr.bf16.gmra.mrb[0].mxu0 %v257
  %v391 = vpop.f32.mrb[0].mxu0
  %v392 = vadd.f32 %v283, %v391
  %v393 = vpop.f32.mrb[0].mxu0
  %v394 = vpop.f32.mrb[0].mxu0
  %v395 = vadd.f32 %v283, %v394
  %v396 = vpop.f32.mrb[0].mxu0
  %397 = vmatprep.mubr.bf16.mxu0 0
  %398 = vmatmul.mubr.bf16.gmra.mrb[0].mxu0 %v258
  %v399 = vpop.f32.mrb[0].mxu0
  %v400 = vadd.f32 %v283, %v399
  %v401 = vpop.f32.mrb[0].mxu0
  %v402 = vpop.f32.mrb[0].mxu0
  %v403 = vadd.f32 %v283, %v402
  %v404 = vpop.f32.mrb[0].mxu0
  %405 = vmatprep.mubr.bf16.mxu0 0
  %406 = vmatmul.mubr.bf16.gmra.mrb[0].mxu0 %v259
  %v407 = vpop.f32.mrb[0].mxu0
  %v408 = vadd.f32 %v283, %v407
  %v409 = vpop.f32.mrb[0].mxu0
  %v410 = vpop.f32.mrb[0].mxu0
  %v411 = vadd.f32 %v283, %v410
  %v412 = vpop.f32.mrb[0].mxu0
  %413 = vmatprep.mubr.bf16.mxu0 0
  %414 = vmatmul.mubr.bf16.gmra.mrb[0].mxu0 %v260
  %v415 = vpop.f32.mrb[0].mxu0
  %v416 = vadd.f32 %v283, %v415
  %v417 = vpop.f32.mrb[0].mxu0
  %v418 = vpop.f32.mrb[0].mxu0
  %v419 = vadd.f32 %v283, %v418
  %v420 = vpop.f32.mrb[0].mxu0
  %421 = vmatprep.mubr.bf16.mxu0 0
  %422 = vmatmul.mubr.bf16.gmra.mrb[0].mxu0 %v261
  %v423 = vpop.f32.mrb[0].mxu0
  %v424 = vadd.f32 %v283, %v423
  %v425 = vpop.f32.mrb[0].mxu0
  %v426 = vpop.f32.mrb[0].mxu0
  %v427 = vadd.f32 %v283, %v426
  %v428 = vpop.f32.mrb[0].mxu0
  %429 = vdwg.mxu0
  %446 = vrot.lane.b32.xlu0 %v368, 96
  %v447 = vpop.permute.xlu0 %446
  %448 = vrot.lane.b32.xlu0 %v371, 96
  %v449 = vpop.permute.xlu0 %448
  %450 = vrot.lane.b32.xlu0 %v376, 96
  %v451 = vpop.permute.xlu0 %450
  %452 = vrot.lane.b32.xlu0 %v379, 96
  %v453 = vpop.permute.xlu0 %452
  %454 = vrot.lane.b32.xlu0 %v384, 96
  %v455 = vpop.permute.xlu0 %454
  %456 = vrot.lane.b32.xlu0 %v387, 96
  %v457 = vpop.permute.xlu0 %456
  %458 = vrot.lane.b32.xlu0 %v392, 96
  %v459 = vpop.permute.xlu0 %458
  %460 = vrot.lane.b32.xlu0 %v395, 96
  %v461 = vpop.permute.xlu0 %460
  %462 = vrot.lane.b32.xlu0 %v400, 96
  %v463 = vpop.permute.xlu0 %462
  %464 = vrot.lane.b32.xlu0 %v403, 96
  %v465 = vpop.permute.xlu0 %464
  %466 = vrot.lane.b32.xlu0 %v408, 96
  %v467 = vpop.permute.xlu0 %466
  %468 = vrot.lane.b32.xlu0 %v411, 96
  %v469 = vpop.permute.xlu0 %468
  %470 = vrot.lane.b32.xlu0 %v416, 96
  %v471 = vpop.permute.xlu0 %470
  %472 = vrot.lane.b32.xlu0 %v419, 96
  %v473 = vpop.permute.xlu0 %472
  %474 = vrot.lane.b32.xlu0 %v424, 96
  %v475 = vpop.permute.xlu0 %474
  %476 = vrot.lane.b32.xlu0 %v427, 96
  %v477 = vpop.permute.xlu0 %476
  %v494 = vmul.f32 %v368, %v447
  %v495 = vmul.f32 %v371, %v449
  %v496 = vmul.f32 %v376, %v451
  %v497 = vmul.f32 %v379, %v453
  %v498 = vmul.f32 %v384, %v455
  %v499 = vmul.f32 %v387, %v457
  %v500 = vmul.f32 %v392, %v459
  %v501 = vmul.f32 %v395, %v461
  %v502 = vmul.f32 %v400, %v463
  %v503 = vmul.f32 %v403, %v465
  %v504 = vmul.f32 %v408, %v467
  %v505 = vmul.f32 %v411, %v469
  %v506 = vmul.f32 %v416, %v471
  %v507 = vmul.f32 %v419, %v473
  %v508 = vmul.f32 %v424, %v475
  %v509 = vmul.f32 %v427, %v477
  %vm510 = vcmask 261120
  %v511 = vsel %vm510, %v494, 0.0
  %512 = vadd.xlane.f32.xlu0 %v511
  %v513 = vpop.xlane.xlu0 %512
  %v514 = vsel %vm510, %v495, 0.0
  %515 = vadd.xlane.f32.xlu0 %v514
  %v516 = vpop.xlane.xlu0 %515
  %v517 = vsel %vm510, %v496, 0.0
  %518 = vadd.xlane.f32.xlu0 %v517
  %v519 = vpop.xlane.xlu0 %518
  %v520 = vsel %vm510, %v497, 0.0
  %521 = vadd.xlane.f32.xlu0 %v520
  %v522 = vpop.xlane.xlu0 %521
  %v523 = vsel %vm510, %v498, 0.0
  %524 = vadd.xlane.f32.xlu0 %v523
  %v525 = vpop.xlane.xlu0 %524
  %v526 = vsel %vm510, %v499, 0.0
  %527 = vadd.xlane.f32.xlu0 %v526
  %v528 = vpop.xlane.xlu0 %527
  %v529 = vsel %vm510, %v500, 0.0
  %530 = vadd.xlane.f32.xlu0 %v529
  %v531 = vpop.xlane.xlu0 %530
  %v532 = vsel %vm510, %v501, 0.0
  %533 = vadd.xlane.f32.xlu0 %v532
  %v534 = vpop.xlane.xlu0 %533
  %v535 = vsel %vm510, %v502, 0.0
  %536 = vadd.xlane.f32.xlu0 %v535
  %v537 = vpop.xlane.xlu0 %536
  %v538 = vsel %vm510, %v503, 0.0
  %539 = vadd.xlane.f32.xlu0 %v538
  %v540 = vpop.xlane.xlu0 %539
  %v541 = vsel %vm510, %v504, 0.0
  %542 = vadd.xlane.f32.xlu0 %v541
  %v543 = vpop.xlane.xlu0 %542
  %v544 = vsel %vm510, %v505, 0.0
  %545 = vadd.xlane.f32.xlu0 %v544
  %v546 = vpop.xlane.xlu0 %545
  %v547 = vsel %vm510, %v506, 0.0
  %548 = vadd.xlane.f32.xlu0 %v547
  %v549 = vpop.xlane.xlu0 %548
  %v550 = vsel %vm510, %v507, 0.0
  %551 = vadd.xlane.f32.xlu0 %v550
  %v552 = vpop.xlane.xlu0 %551
  %v553 = vsel %vm510, %v508, 0.0
  %554 = vadd.xlane.f32.xlu0 %v553
  %v555 = vpop.xlane.xlu0 %554
  %v556 = vsel %vm510, %v509, 0.0
  %557 = vadd.xlane.f32.xlu0 %v556
  %v558 = vpop.xlane.xlu0 %557
  %v575 = vlaneseq
  %v576 = vand.u32 %v575, 127
  %v577 = vlaneseq
  %v578 = vshrl.u32 %v577, 7
  %v579 = vsub.s32 %v576, %v578
  %v580 = vrot.slane %v513, %v579
  %v581 = vadd.s32 %v576, 4294967288
  %v582 = vlaneseq
  %v583 = vshrl.u32 %v582, 7
  %v584 = vsub.s32 %v581, %v583
  %v585 = vrot.slane %v516, %v584
  %vm586 = vcmask 130112
  %v587 = vsel %vm586, %v585, %v580
  %v588 = vadd.s32 %v576, 4294967280
  %v589 = vlaneseq
  %v590 = vshrl.u32 %v589, 7
  %v591 = vsub.s32 %v588, %v590
  %v592 = vrot.slane %v519, %v591
  %vm593 = vcmask 195712
  %v594 = vsel %vm593, %v592, %v587
  %v595 = vadd.s32 %v576, 4294967272
  %v596 = vlaneseq
  %v597 = vshrl.u32 %v596, 7
  %v598 = vsub.s32 %v595, %v597
  %v599 = vrot.slane %v522, %v598
  %vm600 = vcmask 261312
  %v601 = vsel %vm600, %v599, %v594
  %v602 = vadd.s32 %v576, 4294967264
  %v603 = vlaneseq
  %v604 = vshrl.u32 %v603, 7
  %v605 = vsub.s32 %v602, %v604
  %v606 = vrot.slane %v525, %v605
  %vm607 = vcmask 326912
  %v608 = vsel %vm607, %v606, %v601
  %v609 = vadd.s32 %v576, 4294967256
  %v610 = vlaneseq
  %v611 = vshrl.u32 %v610, 7
  %v612 = vsub.s32 %v609, %v611
  %v613 = vrot.slane %v528, %v612
  %vm614 = vcmask 392512
  %v615 = vsel %vm614, %v613, %v608
  %v616 = vadd.s32 %v576, 4294967248
  %v617 = vlaneseq
  %v618 = vshrl.u32 %v617, 7
  %v619 = vsub.s32 %v616, %v618
  %v620 = vrot.slane %v531, %v619
  %vm621 = vcmask 458112
  %v622 = vsel %vm621, %v620, %v615
  %v623 = vadd.s32 %v576, 4294967240
  %v624 = vlaneseq
  %v625 = vshrl.u32 %v624, 7
  %v626 = vsub.s32 %v623, %v625
  %v627 = vrot.slane %v534, %v626
  %vm628 = vcmask 523712
  %v629 = vsel %vm628, %v627, %v622
  %v630 = vadd.s32 %v576, 4294967232
  %v631 = vlaneseq
  %v632 = vshrl.u32 %v631, 7
  %v633 = vsub.s32 %v630, %v632
  %v634 = vrot.slane %v537, %v633
  %vm635 = vcmask 589312
  %v636 = vsel %vm635, %v634, %v629
  %v637 = vadd.s32 %v576, 4294967224
  %v638 = vlaneseq
  %v639 = vshrl.u32 %v638, 7
  %v640 = vsub.s32 %v637, %v639
  %v641 = vrot.slane %v540, %v640
  %vm642 = vcmask 654912
  %v643 = vsel %vm642, %v641, %v636
  %v644 = vadd.s32 %v576, 4294967216
  %v645 = vlaneseq
  %v646 = vshrl.u32 %v645, 7
  %v647 = vsub.s32 %v644, %v646
  %v648 = vrot.slane %v543, %v647
  %vm649 = vcmask 720512
  %v650 = vsel %vm649, %v648, %v643
  %v651 = vadd.s32 %v576, 4294967208
  %v652 = vlaneseq
  %v653 = vshrl.u32 %v652, 7
  %v654 = vsub.s32 %v651, %v653
  %v655 = vrot.slane %v546, %v654
  %vm656 = vcmask 786112
  %v657 = vsel %vm656, %v655, %v650
  %v658 = vadd.s32 %v576, 4294967200
  %v659 = vlaneseq
  %v660 = vshrl.u32 %v659, 7
  %v661 = vsub.s32 %v658, %v660
  %v662 = vrot.slane %v549, %v661
  %vm663 = vcmask 851712
  %v664 = vsel %vm663, %v662, %v657
  %v665 = vadd.s32 %v576, 4294967192
  %v666 = vlaneseq
  %v667 = vshrl.u32 %v666, 7
  %v668 = vsub.s32 %v665, %v667
  %v669 = vrot.slane %v552, %v668
  %vm670 = vcmask 917312
  %v671 = vsel %vm670, %v669, %v664
  %v672 = vadd.s32 %v576, 4294967184
  %v673 = vlaneseq
  %v674 = vshrl.u32 %v673, 7
  %v675 = vsub.s32 %v672, %v674
  %v676 = vrot.slane %v555, %v675
  %vm677 = vcmask 982912
  %v678 = vsel %vm677, %v676, %v671
  %v679 = vadd.s32 %v576, 4294967176
  %v680 = vlaneseq
  %v681 = vshrl.u32 %v680, 7
  %v682 = vsub.s32 %v679, %v681
  %v683 = vrot.slane %v558, %v682
  %vm684 = vcmask 1048512
  %v685 = vsel %vm684, %v683, %v678
  %687 = vst [vmem:[%s5] sm:$0x1] %v685
  // Predicated region
  $region22: #{two_tower_forward.1} parent=0 // pred_check
    _
  $region23: #{two_tower_forward.1} parent=0 // pred_check_branch
    %689 = sbr.rel (0) target = $region25
  $region24: #{two_tower_forward.1} parent=0 // pred_region
    _
  $region25: #{two_tower_forward.1} parent=0 // pred_fallthru
    _
  // Predicated region
  $region26: #{two_tower_forward.1} parent=0 // pred_check
    _
  $region27: #{two_tower_forward.1} parent=0 // pred_check_branch
    %691 = sbr.rel (0) target = $region29
  $region28: #{two_tower_forward.1} parent=0 // pred_region
    _
  $region29: #{two_tower_forward.1} parent=0 // pred_fallthru
    _

</llo_original>
